<compile_context>
chip_gen: v5e
topology: v5e:2x2
jax: 0.10.0
libtpu: 0.0.40
codegen_flags: <defaults>
</compile_context>

<pallas_src>
import functools
import math

import jax
import jax.numpy as jnp
from jax.experimental import pallas as pl
from jax.experimental.pallas import tpu as pltpu

_VMEM_LIMIT = 48 * 1024 * 1024  # leave headroom below v7x's 64 MiB physical VMEM


# --------------------------- tiled linear:  y = x @ w + b ---------------------------

def _linear_kernel(x_ref, w_ref, b_ref, o_ref, acc_ref):
    kk = pl.program_id(2)

    @pl.when(kk == 0)
    def _():
        # Initialize the f32 accumulator with the broadcast bias (no extra add at the end).
        acc_ref[...] = jnp.broadcast_to(b_ref[...].astype(jnp.float32), acc_ref.shape)

    acc_ref[...] += jnp.dot(x_ref[...], w_ref[...],
                            preferred_element_type=jnp.float32)

    @pl.when(kk == pl.num_programs(2) - 1)
    def _():
        o_ref[...] = acc_ref[...].astype(o_ref.dtype)


def linear(x, w, b, *, out_dtype=None, tile_m=256, tile_n=256, tile_k=512):
    """x: [M, K] (bf16), w: [K, N] (bf16), b: [1, N] (f32)."""
    m, k = x.shape
    k2, n = w.shape
    assert k == k2
    out_dtype = out_dtype or x.dtype

    tm = min(tile_m, m)
    tn = min(tile_n, n)
    tk = min(tile_k, k)
    assert m % tm == 0 and n % tn == 0 and k % tk == 0, "problem dims must tile evenly"

    grid = (m // tm, n // tn, k // tk)
    flops = 2 * m * n * k
    # x is re-streamed once per column tile, w once per row tile, bias every step.
    bytes_accessed = (grid[1] * m * k * x.dtype.itemsize
                      + grid[0] * k * n * w.dtype.itemsize
                      + grid[0] * grid[2] * b.size * b.dtype.itemsize
                      + m * n * jnp.dtype(out_dtype).itemsize)

    return pl.pallas_call(
        _linear_kernel,
        out_shape=jax.ShapeDtypeStruct((m, n), out_dtype),
        grid_spec=pltpu.PrefetchScalarGridSpec(
            num_scalar_prefetch=0,
            grid=grid,
            in_specs=[
                pl.BlockSpec((tm, tk), lambda i, j, l: (i, l)),   # x row/K tile
                pl.BlockSpec((tk, tn), lambda i, j, l: (l, j)),   # w K/col tile
                pl.BlockSpec((1, tn), lambda i, j, l: (0, j)),    # bias (f32)
            ],
            out_specs=pl.BlockSpec((tm, tn), lambda i, j, l: (i, j)),
            scratch_shapes=[pltpu.VMEM((tm, tn), jnp.float32)],
        ),
        compiler_params=pltpu.CompilerParams(
            dimension_semantics=("parallel", "parallel", "arbitrary"),
            vmem_limit_bytes=_VMEM_LIMIT,
        ),
        cost_estimate=pl.CostEstimate(flops=flops, transcendentals=0,
                                      bytes_accessed=int(bytes_accessed)),
    )(x, w, b)


# ----------------------- flash-style multi-head attention kernel --------------------

def _flash_attn_step(q_ref, k_ref, v_ref, mask_ref, o_ref, m_sc, l_sc, acc_sc, *, hb, d_h):
    """One (batch, head-group, q-tile, kv-tile) grid step with online softmax.

    q_ref: (tq, hb*d_h) bf16, k_ref/v_ref: (tk, hb*d_h) bf16, o_ref: (tq, hb*d_h)
    mask_ref: (tq, tk) int8 or None (True/1 = masked out, matching masked_fill(-1e9))
    scratch: m_sc/l_sc (hb, tq, 1) f32, acc_sc (hb, tq, d_h) f32 -- resident across kv steps.
    Scale 1/sqrt(d_k) is pre-folded into the q projection weights.
    """
    ki = pl.program_id(3)

    @pl.when(ki == 0)
    def _():
        m_sc[...] = jnp.full_like(m_sc, -jnp.inf)
        l_sc[...] = jnp.zeros_like(l_sc)
        acc_sc[...] = jnp.zeros_like(acc_sc)

    if mask_ref is not None:
        masked = mask_ref[...] != 0                                   # (tq, tk) bool

    for h in range(hb):                                               # static head loop
        lo, hi = h * d_h, (h + 1) * d_h
        qh = q_ref[:, lo:hi]                                          # (tq, d_h) bf16
        kh = k_ref[:, lo:hi]                                          # (tk, d_h) bf16
        s = jax.lax.dot_general(qh, kh, (((1,), (1,)), ((), ())),
                                preferred_element_type=jnp.float32)   # (tq, tk) f32
        if mask_ref is not None:
            s = jnp.where(masked, -1e9, s)

        m_prev = m_sc[h]                                              # (tq, 1)
        m_new = jnp.maximum(m_prev, jnp.max(s, axis=-1, keepdims=True))
        alpha = jnp.exp(m_prev - m_new)
        p = jnp.exp(s - m_new)                                        # unnormalised probs
        l_sc[h] = alpha * l_sc[h] + jnp.sum(p, axis=-1, keepdims=True)
        acc_sc[h] = alpha * acc_sc[h] + jnp.dot(p.astype(v_ref.dtype), v_ref[:, lo:hi],
                                                preferred_element_type=jnp.float32)
        m_sc[h] = m_new

    @pl.when(ki == pl.num_programs(3) - 1)
    def _():
        for h in range(hb):
            inv = pl.reciprocal(l_sc[h], approx=True)                 # EUP slot, ~free
            o_ref[:, h * d_h:(h + 1) * d_h] = (acc_sc[h] * inv).astype(o_ref.dtype)


def _flash_kernel(q_ref, k_ref, v_ref, o_ref, m_sc, l_sc, acc_sc, *, hb, d_h):
    _flash_attn_step(q_ref, k_ref, v_ref, None, o_ref, m_sc, l_sc, acc_sc, hb=hb, d_h=d_h)


def _flash_kernel_masked(q_ref, k_ref, v_ref, mask_ref, o_ref, m_sc, l_sc, acc_sc, *, hb, d_h):
    _flash_attn_step(q_ref, k_ref, v_ref, mask_ref, o_ref, m_sc, l_sc, acc_sc, hb=hb, d_h=d_h)


def flash_mha(q, k, v, mask=None, *, n_head_groups, heads_per_block, d_head,
              q_block_off=0, k_block_off=0, v_block_off=0, mask_div=1,
              tile_q=256, tile_k=256, out_dtype=None):
    """Flash attention over head-concat layout.

    q/k/v: (B, S, ...) bf16 -- the last dim is indexed by head-group blocks of width
    heads_per_block*d_head starting at *_block_off (so q, k, v may all alias one fused
    QKV array).  mask: (B // mask_div, Sq, Sk) int8 (1 = masked) or None.
    Returns (B, Sq, n_head_groups*heads_per_block*d_head) in head-concat layout.
    """
    B, Sq, _ = q.shape
    Sk = k.shape[1]
    hd = heads_per_block * d_head
    out_dtype = out_dtype or q.dtype

    tq = min(tile_q, Sq)
    tk = min(tile_k, Sk)
    assert Sq % tq == 0 and Sk % tk == 0, "sequence lengths must tile evenly"

    grid = (B, n_head_groups, Sq // tq, Sk // tk)

    in_specs = [
        pl.BlockSpec((None, tq, hd), lambda b, g, qi, ki: (b, qi, g + q_block_off)),
        pl.BlockSpec((None, tk, hd), lambda b, g, qi, ki: (b, ki, g + k_block_off)),
        pl.BlockSpec((None, tk, hd), lambda b, g, qi, ki: (b, ki, g + v_block_off)),
    ]
    operands = [q, k, v]
    if mask is None:
        kernel = functools.partial(_flash_kernel, hb=heads_per_block, d_h=d_head)
    else:
        kernel = functools.partial(_flash_kernel_masked, hb=heads_per_block, d_h=d_head)
        in_specs.append(
            pl.BlockSpec((None, tq, tk), lambda b, g, qi, ki: (b // mask_div, qi, ki)))
        operands.append(mask)

    n_heads_total = n_head_groups * heads_per_block
    esize = q.dtype.itemsize
    flops = 4 * B * n_heads_total * Sq * Sk * d_head
    trans = B * n_heads_total * Sq * Sk
    bytes_accessed = (B * Sq * n_heads_total * d_head * esize               # q
                      + 2 * B * Sk * n_heads_total * d_head * esize * (Sq // tq)  # k, v
                      + B * Sq * n_heads_total * d_head * jnp.dtype(out_dtype).itemsize)
    if mask is not None:
        bytes_accessed += mask.size * mask.dtype.itemsize * n_head_groups * max(1, B // mask.shape[0])

    return pl.pallas_call(
        kernel,
        out_shape=jax.ShapeDtypeStruct((B, Sq, n_head_groups * hd), out_dtype),
        grid_spec=pltpu.PrefetchScalarGridSpec(
            num_scalar_prefetch=0,
            grid=grid,
            in_specs=in_specs,
            out_specs=pl.BlockSpec((None, tq, hd), lambda b, g, qi, ki: (b, qi, g)),
            scratch_shapes=[
                pltpu.VMEM((heads_per_block, tq, 1), jnp.float32),      # running max
                pltpu.VMEM((heads_per_block, tq, 1), jnp.float32),      # running denom
                pltpu.VMEM((heads_per_block, tq, d_head), jnp.float32),  # running output
            ],
        ),
        compiler_params=pltpu.CompilerParams(
            dimension_semantics=("parallel", "parallel", "parallel", "arbitrary"),
            vmem_limit_bytes=_VMEM_LIMIT,
        ),
        cost_estimate=pl.CostEstimate(flops=flops, transcendentals=trans,
                                      bytes_accessed=int(bytes_accessed)),
    )(*operands)


def _head_group(heads, d_k):
    """Smallest head-group size hb (dividing heads) whose width hb*d_k is lane-aligned
    (multiple of 128) so attention blocks are lane-dense.  None if impossible (tiny
    d_model) -- the caller then uses hb=heads with full-d_model blocks."""
    for hb in range(1, heads + 1):
        if heads % hb == 0 and (hb * d_k) % 128 == 0:
            return hb
    return None


# --------------------------------- MHA forward pass ---------------------------------

def prepare_params(raw, heads):
    """One-time parameter prep: cast weights to bf16, fold 1/sqrt(d_k) into the q
    projection, and build a fused [d, 3d] QKV weight for the self-attention path.
    Raw weights are stored pre-transposed relative to nn.Linear (w is [d_in, d_out])."""
    d_model = raw["wq"].shape[0]
    scale = 1.0 / math.sqrt(d_model // heads)
    cdt = jnp.bfloat16
    wq = (raw["wq"] * scale).astype(cdt)
    bq = (raw["bq"] * scale).astype(jnp.float32)
    wk = raw["wk"].astype(cdt)
    bk = raw["bk"].astype(jnp.float32)
    wv = raw["wv"].astype(cdt)
    bv = raw["bv"].astype(jnp.float32)
    return dict(
        wq=wq, bq=bq, wk=wk, bk=bk, wv=wv, bv=bv,
        wo=raw["wo"].astype(cdt), bo=raw["bo"].astype(jnp.float32),
        wqkv=jnp.concatenate([wq, wk, wv], axis=1),
        bqkv=jnp.concatenate([bq, bk, bv], axis=1),
    )


def multi_head_attention(q_in, k_in, v_in, params, *, heads, tp=0, mask=None):
    """q_in/k_in/v_in: [bs, seq, d_model] f32.  params: output of prepare_params.
    mask: [bs, Lq, Lk] bool (True = masked out) or None."""
    bs, seq, d_model = q_in.shape
    d_k = d_model // heads
    cdt = jnp.bfloat16

    # Compact mask: int8, [bs, Lq, Lk], no per-head replication, no f32 bias tensor.
    mask_i8 = None if mask is None else mask.astype(jnp.int8)

    self_attn = (q_in is k_in) and (k_in is v_in)

    if self_attn:
        # Fused QKV projection: activations read once, one lane-dense [d, 3d] matmul.
        qkv = linear(q_in.reshape(bs * seq, d_model).astype(cdt),
                     params["wqkv"], params["bqkv"],
                     out_dtype=cdt).reshape(bs, seq, 3 * d_model)
        qp = kp = vp = None
    else:
        def proj(x, w, b):
            return linear(x.reshape(bs * seq, d_model).astype(cdt), w, b,
                          out_dtype=cdt).reshape(bs, seq, d_model)
        qp = proj(q_in, params["wq"], params["bq"])
        kp = proj(k_in, params["wk"], params["bk"])
        vp = proj(v_in, params["wv"], params["bv"])

    hb = _head_group(heads, d_k)

    # TODO(synk): dropout on the attention probabilities is eval-mode identity here;
    #             training-mode dropout would use pltpu.prng_seed + pltpu.prng_random_bits.
    if tp != 1:
        if self_attn and hb is not None:
            # Lane-aligned head groups: attention BlockSpecs index directly into the
            # fused QKV array -- no slicing, no transposes, lane-dense output blocks.
            n_hg = heads // hb
            attn = flash_mha(qkv, qkv, qkv, mask_i8,
                             n_head_groups=n_hg, heads_per_block=hb, d_head=d_k,
                             q_block_off=0, k_block_off=n_hg, v_block_off=2 * n_hg)
        else:
            if self_attn:
                # head-group width not lane-aligned at these tiny dims: slice the fused
                # projection into separate (bs, seq, d_model) activations instead.
                qp = qkv[:, :, :d_model]
                kp = qkv[:, :, d_model:2 * d_model]
                vp = qkv[:, :, 2 * d_model:]
            hb_eff = hb if hb is not None else heads
            attn = flash_mha(qp, kp, vp, mask_i8,
                             n_head_groups=heads // hb_eff, heads_per_block=hb_eff,
                             d_head=d_k)
        # Attention output is already in the head-concat (bs, seq, d_model) layout ->
        # no transposes before the output projection.
        out = linear(attn.reshape(bs * seq, d_model), params["wo"], params["bo"],
                     out_dtype=jnp.float32)
        return out.reshape(bs, seq, d_model)

    # ---- tp == 1: attend over the per-head feature axis (length-d_k "sequence") ----
    if self_attn:
        qp = qkv[:, :, :d_model]
        kp = qkv[:, :, d_model:2 * d_model]
        vp = qkv[:, :, 2 * d_model:]

    def to_headfirst_t(x):  # (bs, seq, d_model) -> (bs*heads, d_k, seq)
        return (x.reshape(bs, seq, heads, d_k)
                 .transpose(0, 2, 3, 1)
                 .reshape(bs * heads, d_k, seq))

    attn = flash_mha(to_headfirst_t(qp), to_headfirst_t(kp), to_headfirst_t(vp),
                     mask_i8, n_head_groups=1, heads_per_block=1, d_head=seq,
                     mask_div=heads)
    # TODO(synk): the PyTorch source gates the post-attention transpose on an undefined
    #             global `tf` (NameError in the original); treated here as mirroring `tp`.
    attn = (attn.reshape(bs, heads, d_k, seq)
                .transpose(0, 3, 1, 2)
                .reshape(bs * seq, d_model))
    out = linear(attn, params["wo"], params["bo"], out_dtype=jnp.float32)
    return out.reshape(bs, seq, d_model)


# ------------------------------------ reference --------------------------------------

def _ref_mha(q_in, k_in, v_in, raw, heads, tp=0, mask=None):
    bs, seq, d_model = q_in.shape
    d_k = d_model // heads

    def proj(x, w, b):
        y = x.reshape(bs * seq, d_model) @ w + b
        return y.reshape(bs, seq, heads, d_k).transpose(0, 2, 1, 3)

    q = proj(q_in, raw["wq"], raw["bq"])
    k = proj(k_in, raw["wk"], raw["bk"])
    v = proj(v_in, raw["wv"], raw["bv"])
    if tp == 1:
        q, k, v = (jnp.swapaxes(t, 2, 3) for t in (q, k, v))
    s = jnp.einsum("bhqd,bhkd->bhqk", q, k) / math.sqrt(d_k)
    if mask is not None:
        s = jnp.where(mask[:, None, :, :], -1e9, s)
    p = jax.nn.softmax(s, axis=-1)
    o = jnp.einsum("bhqk,bhkd->bhqd", p, v)
    if tp == 1:
        o = jnp.swapaxes(o, 2, 3)
    concat = o.transpose(0, 2, 1, 3).reshape(bs * seq, d_model)
    return (concat @ raw["wo"] + raw["bo"]).reshape(bs, seq, d_model)


if __name__ == "__main__":
    batch, seq, d_model, heads = 2, 8, 32, 4

    key = jax.random.PRNGKey(0)
    keys = jax.random.split(key, 11)
    bound = 1.0 / math.sqrt(d_model)

    def init_linear(kw, kb):
        w = jax.random.uniform(kw, (d_model, d_model), jnp.float32, -bound, bound)
        b = jax.random.uniform(kb, (1, d_model), jnp.float32, -bound, bound)
        return w, b

    wq, bq = init_linear(keys[0], keys[1])
    wk, bk = init_linear(keys[2], keys[3])
    wv, bv = init_linear(keys[4], keys[5])
    wo, bo = init_linear(keys[6], keys[7])
    raw = dict(wq=wq, bq=bq, wk=wk, bk=bk, wv=wv, bv=bv, wo=wo, bo=bo)
    params = prepare_params(raw, heads)

    q_in = jax.random.normal(keys[8], (batch, seq, d_model), jnp.float32)
    k_in = jax.random.normal(keys[9], (batch, seq, d_model), jnp.float32)
    v_in = jax.random.normal(keys[10], (batch, seq, d_model), jnp.float32)

    # path 1: cross-attention, tp=0, no mask
    out = jax.block_until_ready(
        multi_head_attention(q_in, k_in, v_in, params, heads=heads, tp=0, mask=None))
    ref = _ref_mha(q_in, k_in, v_in, raw, heads)
    assert jnp.allclose(out, ref, atol=5e-2, rtol=5e-2), "no-mask mismatch vs reference"

    # path 2: cross-attention, tp=0, causal mask (True = masked out)
    causal = jnp.broadcast_to(jnp.triu(jnp.ones((seq, seq), dtype=bool), k=1),
                              (batch, seq, seq))
    out_m = jax.block_until_ready(
        multi_head_attention(q_in, k_in, v_in, params, heads=heads, tp=0, mask=causal))
    ref_m = _ref_mha(q_in, k_in, v_in, raw, heads, mask=causal)
    assert jnp.allclose(out_m, ref_m, atol=5e-2, rtol=5e-2), "masked mismatch vs reference"

    # path 3: self-attention (fused QKV projection), tp=0, causal mask
    out_s = jax.block_until_ready(
        multi_head_attention(q_in, q_in, q_in, params, heads=heads, tp=0, mask=causal))
    ref_s = _ref_mha(q_in, q_in, q_in, raw, heads, mask=causal)
    assert jnp.allclose(out_s, ref_s, atol=5e-2, rtol=5e-2), "self-attn mismatch vs reference"

    # path 4: tp=1 (per-head feature-axis attention), no mask
    out_t = jax.block_until_ready(
        multi_head_attention(q_in, k_in, v_in, params, heads=heads, tp=1, mask=None))
    ref_t = _ref_mha(q_in, k_in, v_in, raw, heads, tp=1)
    assert jnp.allclose(out_t, ref_t, atol=5e-2, rtol=5e-2), "tp=1 mismatch vs reference"

    print("KERNEL_OK")
</pallas_src>

<mosaic_0001>
module attributes {stable_mosaic.version = 11 : i64} {
  func.func @_linear_kernel(%arg0: i32, %arg1: i32, %arg2: i32, %arg3: memref<16x32xbf16, #tpu.memory_space<vmem>>, %arg4: memref<32x32xbf16, #tpu.memory_space<vmem>>, %arg5: memref<1x32xf32, #tpu.memory_space<vmem>>, %arg6: memref<16x32xbf16, #tpu.memory_space<vmem>>, %arg7: memref<16x32xf32, #tpu.memory_space<vmem>>) attributes {dimension_semantics = [#tpu.dimension_semantics<parallel>, #tpu.dimension_semantics<parallel>, #tpu.dimension_semantics<arbitrary>], iteration_bounds = array<i64: 1, 1, 1>, scalar_prefetch = 0 : i64, scratch_operands = 1 : i64, tpu.core_type = #tpu.core_type<tc>, window_params = [{transform_indices = @transform_0, window_bounds = array<i64: 16, 32>}, {transform_indices = @transform_1, window_bounds = array<i64: 32, 32>}, {transform_indices = @transform_2, window_bounds = array<i64: 1, 32>}, {transform_indices = @transform_3, window_bounds = array<i64: 16, 32>}]} {
    %c0_i32 = arith.constant 0 : i32
    %0 = arith.cmpi eq, %arg2, %c0_i32 : i32
    %1 = arith.extui %0 : i1 to i32
    %c0_i32_0 = arith.constant 0 : i32
    %2 = arith.cmpi ne, %1, %c0_i32_0 : i32
    scf.if %2 {
      %c0_10 = arith.constant 0 : index
      %c0_11 = arith.constant 0 : index
      %12 = vector.load %arg5[%c0_10, %c0_11] : memref<1x32xf32, #tpu.memory_space<vmem>>, vector<1x32xf32>
      %13 = vector.shape_cast %12 : vector<1x32xf32> to vector<1x32xf32>
      %14 = vector.broadcast %13 : vector<1x32xf32> to vector<16x32xf32>
      %c0_12 = arith.constant 0 : index
      %c0_13 = arith.constant 0 : index
      %15 = vector.load %arg7[%c0_12, %c0_13] : memref<16x32xf32, #tpu.memory_space<vmem>>, vector<16x32xf32>
      tpu.vector_store %arg7[%c0_12, %c0_13], %14 {strides = array<i32>} : memref<16x32xf32, #tpu.memory_space<vmem>>, vector<16x32xf32>,
    } else {
    }
    %c0 = arith.constant 0 : index
    %c0_1 = arith.constant 0 : index
    %3 = vector.load %arg7[%c0, %c0_1] : memref<16x32xf32, #tpu.memory_space<vmem>>, vector<16x32xf32>
    %c0_2 = arith.constant 0 : index
    %c0_3 = arith.constant 0 : index
    %4 = vector.load %arg3[%c0_2, %c0_3] : memref<16x32xbf16, #tpu.memory_space<vmem>>, vector<16x32xbf16>
    %c0_4 = arith.constant 0 : index
    %c0_5 = arith.constant 0 : index
    %5 = vector.load %arg4[%c0_4, %c0_5] : memref<32x32xbf16, #tpu.memory_space<vmem>>, vector<32x32xbf16>
    %cst = arith.constant dense<0.000000e+00> : vector<16x32xf32>
    %6 = tpu.matmul %4, %5, %cst {dimension_numbers = #tpu.dot_dimension_numbers<[1], [0], [0], [1], [0, 0, 1, 1], [], []>} : vector<16x32xbf16>, vector<32x32xbf16>, vector<16x32xf32> -> vector<16x32xf32>
    %7 = arith.addf %3, %6 : vector<16x32xf32>
    %c0_6 = arith.constant 0 : index
    %c0_7 = arith.constant 0 : index
    %8 = vector.load %arg7[%c0_6, %c0_7] : memref<16x32xf32, #tpu.memory_space<vmem>>, vector<16x32xf32>
    tpu.vector_store %arg7[%c0_6, %c0_7], %7 {strides = array<i32>} : memref<16x32xf32, #tpu.memory_space<vmem>>, vector<16x32xf32>,
    %c0_i32_8 = arith.constant 0 : i32
    %9 = arith.cmpi eq, %arg2, %c0_i32_8 : i32
    %10 = arith.extui %9 : i1 to i32
    %c0_i32_9 = arith.constant 0 : i32
    %11 = arith.cmpi ne, %10, %c0_i32_9 : i32
    scf.if %11 {
      %c0_10 = arith.constant 0 : index
      %c0_11 = arith.constant 0 : index
      %12 = vector.load %arg7[%c0_10, %c0_11] : memref<16x32xf32, #tpu.memory_space<vmem>>, vector<16x32xf32>
      %13 = arith.truncf %12 : vector<16x32xf32> to vector<16x32xbf16>
      %c0_12 = arith.constant 0 : index
      %c0_13 = arith.constant 0 : index
      %14 = vector.load %arg6[%c0_12, %c0_13] : memref<16x32xbf16, #tpu.memory_space<vmem>>, vector<16x32xbf16>
      tpu.vector_store %arg6[%c0_12, %c0_13], %13 {strides = array<i32>} : memref<16x32xbf16, #tpu.memory_space<vmem>>, vector<16x32xbf16>,
    } else {
    }
    return
  }
  func.func @transform_0(%arg0: i32, %arg1: i32, %arg2: i32) -> (i32, i32) {
    %c0_i32 = arith.constant 0 : i32
    return %arg0, %arg2 : i32, i32
  }
  func.func @transform_1(%arg0: i32, %arg1: i32, %arg2: i32) -> (i32, i32) {
    %c0_i32 = arith.constant 0 : i32
    return %arg2, %arg1 : i32, i32
  }
  func.func @transform_2(%arg0: i32, %arg1: i32, %arg2: i32) -> (i32, i32) {
    %c0_i32 = arith.constant 0 : i32
    %c0_i32_0 = arith.constant 0 : i32
    return %c0_i32, %arg1 : i32, i32
  }
  func.func @transform_3(%arg0: i32, %arg1: i32, %arg2: i32) -> (i32, i32) {
    %c0_i32 = arith.constant 0 : i32
    return %arg0, %arg1 : i32, i32
  }
}

</mosaic_0001>

<llo_original>
// kernel: tpu_custom_call.1
$region0: #{tpu_custom_call.1}
  #allocation0 [shape = 'u32[]', space=smem, size = 0x4, offset = 0x4, fixed_abs, tag = 'smem constant byte address 0x4 - core index']
  #allocation1 [shape = 'u32[72,128]{1,0:T(1,128)}', space=vmem, size = 0x9000, scoped, tag = 'internal scratch']
  #allocation2 [shape = 'f32[16,32]{1,0:T(8,128)}', space=vmem, size = 0x2000, scoped, tag = 'scratch operand']
  %s0 = inlined_call_operand.hbm [shape: bf16[16,32], index: 0, kind: input, shape index: {}]
  %s1 = inlined_call_operand.hbm [shape: bf16[32,32], index: 1, kind: input, shape index: {}]
  %s2 = inlined_call_operand.vmem [shape: f32[1,32], index: 2, kind: input, shape index: {}]
  %s3 = inlined_call_operand.hbm [shape: bf16[16,32], index: 3, kind: output, shape index: {}]
  %s4 = sld [smem:[#allocation0]]
  $region38: #{tpu_custom_call.1} parent=0
    _
  %s6 = ssub.s32 1, %s4
  %s7 = scalar_select 0, %s6, %s4
  $region1: #{tpu_custom_call.1} parent=0
    #allocation3 [shape = 'u8[4096]{0}', space=vmem, size = 0x1000, scoped, tag = 'input window, operand 0, single buffered']
    #allocation4 [shape = 's32[1]{0}', space=sflag, size = 0x4, scoped, tag = 'scoped memory for tpu_custom_call.1']
    #allocation5 [shape = 's32[1]{0}', space=sflag, size = 0x4, scoped, tag = 'scoped memory for tpu_custom_call.1']
    #allocation6 [shape = 'u8[8192]{0}', space=vmem, size = 0x2000, scoped, tag = 'input window, operand 1, single buffered']
    #allocation7 [shape = 's32[1]{0}', space=sflag, size = 0x4, scoped, tag = 'scoped memory for tpu_custom_call.1']
    #allocation8 [shape = 'u8[4096]{0}', space=vmem, size = 0x1000, scoped, tag = 'output window, operand 0, single buffered']
    %8 = vsyncpa [#allocation4], 0
    %9 = vsyncpa [#allocation7], 0
    %10 = vsyncpa [#allocation5], 0
    // Predicated region
    $region2: #{tpu_custom_call.1} parent=1 // pred_check
      _
    $region3: #{tpu_custom_call.1} parent=1 // pred_check_branch
      %12 = sbr.rel (0) target = $region5
    $region4: #{tpu_custom_call.1} parent=1 // pred_region
      %14 = vsyncadd [#allocation4], 0
      %s15 = sshll.u32 %s0, 4
      %s16 = int_to_ptr.hbm [resolvable:$true] %s15
      %s17 = sshll.u32 [#allocation3], 4
      %s18 = int_to_ptr.vmem [resolvable:$true] %s17
      %23 = dma.hbm_to_vmem [thread:$0]  %s16, 128, %s18, [#allocation4], 64, 64, 4
    $region5: #{tpu_custom_call.1} parent=1 // pred_fallthru
      _
    // Predicated region
    $region6: #{tpu_custom_call.1} parent=1 // pred_check
      _
    $region7: #{tpu_custom_call.1} parent=1 // pred_check_branch
      %25 = sbr.rel (0) target = $region9
    $region8: #{tpu_custom_call.1} parent=1 // pred_region
      %27 = vsyncadd [#allocation7], 0
      %s28 = sshll.u32 %s1, 4
      %s29 = int_to_ptr.hbm [resolvable:$true] %s28
      %s30 = sshll.u32 [#allocation6], 4
      %s31 = int_to_ptr.vmem [resolvable:$true] %s30
      %36 = dma.hbm_to_vmem [thread:$0]  %s29, 256, %s31, [#allocation7], 64, 64, 4
    $region9: #{tpu_custom_call.1} parent=1 // pred_fallthru
      _
    // Predicated region
    $region10: #{tpu_custom_call.1} parent=1 // pred_check
      _
    $region11: #{tpu_custom_call.1} parent=1 // pred_check_branch
      %38 = sbr.rel (0) target = $region13
    $region12: #{tpu_custom_call.1} parent=1 // pred_region
      _
    $region13: #{tpu_custom_call.1} parent=1 // pred_fallthru
      _
    // Predicated region
    $region14: #{tpu_custom_call.1} parent=1 // pred_check
      _
    $region15: #{tpu_custom_call.1} parent=1 // pred_check_branch
      %40 = sbr.rel (0) target = $region17
    $region16: #{tpu_custom_call.1} parent=1 // pred_region
      %42 = dma.done [#allocation4], 128
    $region17: #{tpu_custom_call.1} parent=1 // pred_fallthru
      _
    // Predicated region
    $region18: #{tpu_custom_call.1} parent=1 // pred_check
      _
    $region19: #{tpu_custom_call.1} parent=1 // pred_check_branch
      %44 = sbr.rel (0) target = $region21
    $region20: #{tpu_custom_call.1} parent=1 // pred_region
      %46 = dma.done [#allocation7], 256
    $region21: #{tpu_custom_call.1} parent=1 // pred_fallthru
      _
    %p48 = scmp.eq.s32.totalorder 0, 0
    // Predicated region
    $region22: #{tpu_custom_call.1} parent=1 // pred_check
      %p49 = pneg %p48
    $region23: #{tpu_custom_call.1} parent=1 // pred_check_branch
      %51 = sbr.rel (%p49) target = $region25
    $region24: #{tpu_custom_call.1} parent=1 // pred_region
      %v52 = vld [vmem:[%s2] sm:$0x1]
      %v54 = vperm.slane %v52, 0
      %vm56 = vcmask 261120
      %57 = vst.msk [vmem:[#allocation2] sm:$0xff] %vm56, %v54
      %58 = vst.msk [vmem:[#allocation2 + $0x8] sm:$0xff] %vm56, %v54
    $region25: #{tpu_custom_call.1} parent=1 // pred_fallthru
      _
    %v59 = vld [vmem:[#allocation2] sm:$0xff]
    %v60 = vld [vmem:[#allocation2 + $0x8] sm:$0xff]
    %v61 = vld [vmem:[#allocation3] sm:$0xf]
    %v62 = vld [vmem:[#allocation3 + $0x4] sm:$0xf]
    %v63 = vld [vmem:[#allocation6] sm:$0xf]
    %v64 = vld [vmem:[#allocation6 + $0x4] sm:$0xf]
    %v65 = vld [vmem:[#allocation6 + $0x8] sm:$0xf]
    %v66 = vld [vmem:[#allocation6 + $0xc] sm:$0xf]
    %v69 = vunpack.c.l.b16 %v61
    %v70 = vunpack.c.l.b16 %v62
    %v71 = vpack.c.b16 %v70, %v69
    %v76 = vunpack.c.l.b16 %v63
    %v77 = vunpack.c.l.b16 %v64
    %v78 = vunpack.c.l.b16 %v65
    %v79 = vunpack.c.l.b16 %v66
    %v80 = vpack.c.b16 %v77, %v76
    %v81 = vpack.c.b16 %v79, %v78
    %vm84 = vcmask 261120
    %v86 = vsel %vm84, %v71, 0
    %88 = vmatpush.bf16.msra.mxu0 0
    %89 = vmatpush.bf16.msra.mxu0 0
    %90 = vmatpush.bf16.msra.mxu0 0
    %91 = vmatpush.bf16.msra.mxu0 0
    %92 = vmatpush.bf16.msra.mxu0 0
    %93 = vmatpush.bf16.msra.mxu0 0
    %94 = vmatpush.bf16.msra.mxu0 %v81
    %95 = vmatpush.bf16.msra.mxu0 %v80
    %96 = vmatmul.bf16.gmra.mxu0 %v86
    %v97 = vpop.f32.mrf.mxu0
    %v98 = vadd.f32 0.0, %v97
    %v99 = vpop.f32.mrf.mxu0
    %v100 = vadd.f32 0.0, %v99
    %101 = vdwg.mxu0
    %v102 = vadd.f32 %v59, %v98
    %v103 = vadd.f32 %v60, %v100
    %104 = vst.msk [vmem:[#allocation2] sm:$0xff] %vm84, %v102
    %105 = vst.msk [vmem:[#allocation2 + $0x8] sm:$0xff] %vm84, %v103
    // Predicated region
    $region26: #{tpu_custom_call.1} parent=1 // pred_check
      %p106 = pneg %p48
    $region27: #{tpu_custom_call.1} parent=1 // pred_check_branch
      %108 = sbr.rel (%p106) target = $region29
    $region28: #{tpu_custom_call.1} parent=1 // pred_region
      %v109 = vld [vmem:[#allocation2] sm:$0xff]
      %v110 = vld [vmem:[#allocation2 + $0x8] sm:$0xff]
      %v111 = vpack.c.bf16 %v109, %v109
      %v112 = vpack.c.bf16 %v110, %v110
      %vm113 = vcmask 257024
      %114 = vst.msk [vmem:[#allocation8] sm:$0xf] %vm113, %v111
      %115 = vst.msk [vmem:[#allocation8 + $0x4] sm:$0xf] %vm113, %v112
    $region29: #{tpu_custom_call.1} parent=1 // pred_fallthru
      _
    // Predicated region
    $region30: #{tpu_custom_call.1} parent=1 // pred_check
      _
    $region31: #{tpu_custom_call.1} parent=1 // pred_check_branch
      %117 = sbr.rel (0) target = $region33
    $region32: #{tpu_custom_call.1} parent=1 // pred_region
      %119 = vsyncadd [#allocation5], 0
      %s120 = sshll.u32 [#allocation8], 4
      %s121 = int_to_ptr.vmem [resolvable:$true] %s120
      %s122 = sshll.u32 %s3, 4
      %s123 = int_to_ptr.hbm [resolvable:$true] %s122
      %128 = dma.vmem_to_hbm [thread:$0]  %s121, 128, %s123, [#allocation5], 64, 64, 4
    $region33: #{tpu_custom_call.1} parent=1 // pred_fallthru
      _
    // Predicated region
    $region34: #{tpu_custom_call.1} parent=1 // pred_check
      _
    $region35: #{tpu_custom_call.1} parent=1 // pred_check_branch
      %130 = sbr.rel (0) target = $region37
    $region36: #{tpu_custom_call.1} parent=1 // pred_region
      %132 = dma.done [#allocation5], 128
    $region37: #{tpu_custom_call.1} parent=1 // pred_fallthru
      _
    %133 = vsyncpa [#allocation4], 1
    %134 = vsyncpa [#allocation7], 1
    %135 = vsyncpa [#allocation5], 1

</llo_original>
